<compile_context>
chip_gen: v7x
topology: tpu7x:2x2x1
jax: 0.10.0
libtpu: 0.0.40
codegen_flags: <defaults>
</compile_context>

<pallas_src>
import functools

import jax
import jax.numpy as jnp
from jax import lax
from jax.experimental import pallas as pl
from jax.experimental.pallas import tpu as pltpu


def _round_up(a, b):
    return -(-a // b) * b


def _doble_conv_kernel(x_ref, w1_ref, b1_ref, w2_ref, b2_ref,
                       ml_ref, mr_ref, o_ref,
                       xe1_ref, xe2_ref, col1_ref, col2_ref, *, W, P, NB):
    """Fused conv3x3+ReLU -> conv3x3+ReLU for a block of NB batch images.

    Layout: channels on sublanes, flattened H*W spatial positions on lanes.

    x_ref : (NB, Cin_p, L) bf16   input images, L = H*W (128-aligned)
    w?_ref: (rows, 9*C_p)  bf16   weights, tap-major columns: (kh*3+kw)*C_p + ci
    b?_ref: (rows, 1)      f32    bias
    ml/mr : (1, L)         f32    left/right column validity masks (0/1)
    o_ref : (NB, Cout, L)  f32    output
    xe?   : (C_p, E)       bf16   zero-extended staging scratch (E = P + L + pad)
    col?  : (9*C_p, L)     bf16   im2col column-matrix scratch
    """
    L = o_ref.shape[-1]

    # Zero ONLY the pad lanes of the staging buffers, once per grid step; the
    # interior [P, P+L) is fully overwritten for every image below.
    for xe in (xe1_ref, xe2_ref):
        c, e = xe.shape
        xe[:, :P] = jnp.zeros((c, P), xe.dtype)
        xe[:, P + L:] = jnp.zeros((c, e - P - L), xe.dtype)

    ml = ml_ref[...]          # (1, L) f32
    mr = mr_ref[...]
    w1 = w1_ref[...]          # bf16, kept hot across the NB images
    w2 = w2_ref[...]
    b1 = b1_ref[...]          # f32
    b2 = b2_ref[...]

    def conv3x3_relu(xe_ref, col_ref, x_val, wmat, bias):
        c = xe_ref.shape[0]
        # Lane-aligned staging store (P is a multiple of 128).
        xe_ref[:, P:P + L] = x_val
        # Implicit im2col: every 3x3 tap is a constant lane offset into the
        # zero-extended buffer.  Build the (9*C, L) column matrix with
        # 16-aligned sublane slice-stores (no jnp.concatenate shuffles).
        for kh in range(3):
            for kw in range(3):
                s = P - (W + 1) + kh * W + kw
                p = xe_ref[:, s:s + L]
                # Left/right padding columns: zero taps that would otherwise
                # wrap into the neighbouring image row (mask math in f32).
                if kw == 0:
                    p = (p * ml).astype(col_ref.dtype)
                elif kw == 2:
                    p = (p * mr).astype(col_ref.dtype)
                tap = kh * 3 + kw
                col_ref[tap * c:(tap + 1) * c, :] = p
        # One MXU matmul per conv: bf16 operands, f32 accumulation.
        y = jnp.dot(wmat, col_ref[...], preferred_element_type=jnp.float32)
        return jnp.maximum(y + bias, 0.0)        # bias + ReLU epilogue in f32

    def body(i, carry):
        mid = conv3x3_relu(xe1_ref, col1_ref, x_ref[i], w1, b1)
        out = conv3x3_relu(xe2_ref, col2_ref, mid.astype(xe2_ref.dtype), w2, b2)
        o_ref[i] = out.astype(o_ref.dtype)
        return carry

    lax.fori_loop(0, NB, body, 0, unroll=True)


def doble_conv_forward(x_nchw, params, *, batch_block=None):
    """Equivalent of DobleConv.forward with BN=False.

    x_nchw: (N, Cin, H, W) float32 (PyTorch layout).
    params: dict with w1 (3,3,Cin,Cmid), b1 (Cmid,), w2 (3,3,Cmid,Cout), b2 (Cout,)
            (HWIO weight layout).
    Returns (N, Cout, H, W) float32.
    """
    # TODO(synk): BN=True branch (BatchNorm2d) not implemented.
    # TODO(synk): for realistic UNet channel counts (C >= 64) switch the single
    #   K=9*C im2col dot to 9 accumulated (Cout,C)x(C,L) dots and band-tile H
    #   (with a 2-row halo) so the per-step footprint stays ~24-28 MiB on v7x
    #   (64 MiB VMEM) with an explicit vmem_limit_bytes.
    N, Cin, H, W = x_nchw.shape
    Cmid = params["w1"].shape[-1]
    Cout = params["w2"].shape[-1]
    L = H * W
    assert L % 128 == 0, "H*W must be a multiple of 128 (pad/band-tile otherwise)"

    SUB = 16                       # bf16 sublane packing
    Cin_p = _round_up(Cin, SUB)
    Cmid_p = _round_up(Cmid, SUB)

    P = _round_up(W + 1, 128)      # lane-aligned zero prefix
    E = P + L + _round_up(W + 1, 128)

    if batch_block is None:
        # Amortize per-step overhead but keep >=2 grid steps for v7x's 2 TCs.
        batch_block = min(8, max(1, N // 2))
    NB = batch_block
    Npad = _round_up(N, NB)

    # bf16 activations, channels-first flattened-spatial layout, padded dims.
    x_flat = x_nchw.reshape(N, Cin, L).astype(jnp.bfloat16)
    x_flat = jnp.pad(x_flat, ((0, Npad - N), (0, Cin_p - Cin), (0, 0)))

    # Weights as (rows, 9*C_p) bf16, tap-major columns matching the im2col rows.
    w1 = params["w1"].astype(jnp.float32)                       # (3,3,Cin,Cmid)
    w1 = jnp.pad(w1, ((0, 0), (0, 0), (0, Cin_p - Cin), (0, 0)))
    w1m = jnp.transpose(w1, (3, 0, 1, 2)).reshape(Cmid, 9 * Cin_p)
    w1m = jnp.pad(w1m, ((0, Cmid_p - Cmid), (0, 0))).astype(jnp.bfloat16)
    b1 = jnp.pad(params["b1"].astype(jnp.float32),
                 (0, Cmid_p - Cmid)).reshape(Cmid_p, 1)

    w2 = params["w2"].astype(jnp.float32)                       # (3,3,Cmid,Cout)
    w2 = jnp.pad(w2, ((0, 0), (0, 0), (0, Cmid_p - Cmid), (0, 0)))
    w2m = jnp.transpose(w2, (3, 0, 1, 2)).reshape(Cout, 9 * Cmid_p)
    w2m = w2m.astype(jnp.bfloat16)
    b2 = params["b2"].astype(jnp.float32).reshape(Cout, 1)

    # Column-edge validity masks (implement padding=1 along W).
    col_idx = jnp.arange(L, dtype=jnp.int32) % W
    mask_l = (col_idx >= 1).astype(jnp.float32).reshape(1, L)
    mask_r = (col_idx <= W - 2).astype(jnp.float32).reshape(1, L)

    kernel = functools.partial(_doble_conv_kernel, W=W, P=P, NB=NB)

    out_flat = pl.pallas_call(
        kernel,
        out_shape=jax.ShapeDtypeStruct((Npad, Cout, L), jnp.float32),
        grid_spec=pltpu.PrefetchScalarGridSpec(
            num_scalar_prefetch=0,
            grid=(Npad // NB,),
            in_specs=[
                pl.BlockSpec((NB, Cin_p, L), lambda n: (n, 0, 0)),
                pl.BlockSpec((Cmid_p, 9 * Cin_p), lambda n: (0, 0)),
                pl.BlockSpec((Cmid_p, 1), lambda n: (0, 0)),
                pl.BlockSpec((Cout, 9 * Cmid_p), lambda n: (0, 0)),
                pl.BlockSpec((Cout, 1), lambda n: (0, 0)),
                pl.BlockSpec((1, L), lambda n: (0, 0)),
                pl.BlockSpec((1, L), lambda n: (0, 0)),
            ],
            out_specs=pl.BlockSpec((NB, Cout, L), lambda n: (n, 0, 0)),
            scratch_shapes=[
                pltpu.VMEM((Cin_p, E), jnp.bfloat16),
                pltpu.VMEM((Cmid_p, E), jnp.bfloat16),
                pltpu.VMEM((9 * Cin_p, L), jnp.bfloat16),
                pltpu.VMEM((9 * Cmid_p, L), jnp.bfloat16),
            ],
        ),
        compiler_params=pltpu.CompilerParams(
            dimension_semantics=("parallel",)),
    )(x_flat, w1m, b1, w2m, b2, mask_l, mask_r)

    return out_flat[:N].reshape(N, Cout, H, W)


def init_params(key, in_channels, mid_channels, out_channels):
    """Deterministic init mimicking PyTorch Conv2d default (uniform +-1/sqrt(fan_in))."""
    k1, k2, k3, k4 = jax.random.split(key, 4)
    fan1 = in_channels * 9
    fan2 = mid_channels * 9
    lim1 = 1.0 / jnp.sqrt(fan1)
    lim2 = 1.0 / jnp.sqrt(fan2)
    # Weights stored in HWIO = (KH, KW, Cin, Cout).
    w1 = jax.random.uniform(k1, (3, 3, in_channels, mid_channels),
                            jnp.float32, -lim1, lim1)
    b1 = jax.random.uniform(k2, (mid_channels,), jnp.float32, -lim1, lim1)
    w2 = jax.random.uniform(k3, (3, 3, mid_channels, out_channels),
                            jnp.float32, -lim2, lim2)
    b2 = jax.random.uniform(k4, (out_channels,), jnp.float32, -lim2, lim2)
    return {"w1": w1, "b1": b1, "w2": w2, "b2": b2}


def _reference_forward(x_nchw, params, *, match_bf16):
    """Pure-JAX reference (lax conv).

    With match_bf16=True it rounds operands (and the mid activation) to bf16
    exactly like the kernel does, so only accumulation order differs.
    """
    def rnd(a):
        a = a.astype(jnp.float32)
        return a.astype(jnp.bfloat16).astype(jnp.float32) if match_bf16 else a

    def conv(x, w, b):
        y = jax.lax.conv_general_dilated(
            rnd(x), rnd(w), window_strides=(1, 1), padding="SAME",
            dimension_numbers=("NCHW", "HWIO", "NCHW"),
            precision=jax.lax.Precision.HIGHEST)
        return jnp.maximum(y + b.astype(jnp.float32)[None, :, None, None], 0.0)

    h = conv(x_nchw, params["w1"], params["b1"])
    h = conv(h, params["w2"], params["b2"])
    return h


if __name__ == "__main__":
    key = jax.random.PRNGKey(0)
    kx, kp = jax.random.split(key)

    N, Cin, H, W = 2, 4, 16, 16
    Cmid, Cout = 8, 8

    x = jax.random.normal(kx, (N, Cin, H, W), jnp.float32)
    params = init_params(kp, Cin, Cmid, Cout)

    fwd = jax.jit(functools.partial(doble_conv_forward, params=params))
    out = fwd(x)
    out = jax.block_until_ready(out)

    assert out.shape == (N, Cout, H, W)

    # Tight check: reference with operands rounded to bf16 exactly as the
    # kernel does (only accumulation order differs).
    ref_bf16 = _reference_forward(x, params, match_bf16=True)
    assert jnp.allclose(out, ref_bf16, atol=2e-3, rtol=2e-3), \
        "mismatch vs bf16-matched reference"

    # Loose sanity check against the full-f32 reference (bf16 operand rounding
    # accounts for the gap).
    ref_f32 = _reference_forward(x, params, match_bf16=False)
    assert jnp.allclose(out, ref_f32, atol=5e-2, rtol=5e-2), \
        "mismatch vs f32 reference"

    print("KERNEL_OK")
</pallas_src>

<mosaic_0001>
module attributes {stable_mosaic.version = 11 : i64} {
  func.func @_doble_conv_kernel(%arg0: i32, %arg1: memref<1x16x256xbf16, #tpu.memory_space<vmem>>, %arg2: memref<16x144xbf16, #tpu.memory_space<vmem>>, %arg3: memref<16x1xf32, #tpu.memory_space<vmem>>, %arg4: memref<8x144xbf16, #tpu.memory_space<vmem>>, %arg5: memref<8x1xf32, #tpu.memory_space<vmem>>, %arg6: memref<1x256xf32, #tpu.memory_space<vmem>>, %arg7: memref<1x256xf32, #tpu.memory_space<vmem>>, %arg8: memref<1x8x256xf32, #tpu.memory_space<vmem>>, %arg9: memref<16x512xbf16, #tpu.memory_space<vmem>>, %arg10: memref<16x512xbf16, #tpu.memory_space<vmem>>, %arg11: memref<144x256xbf16, #tpu.memory_space<vmem>>, %arg12: memref<144x256xbf16, #tpu.memory_space<vmem>>) attributes {dimension_semantics = [#tpu.dimension_semantics<parallel>], iteration_bounds = array<i64: 2>, scalar_prefetch = 0 : i64, scratch_operands = 4 : i64, tpu.core_type = #tpu.core_type<tc>, window_params = [{transform_indices = @transform_0, window_bounds = array<i64: 1, 16, 256>}, {pipeline_mode = #tpu.pipeline_mode<synchronous>, transform_indices = @transform_1, window_bounds = array<i64: 16, 144>}, {pipeline_mode = #tpu.pipeline_mode<synchronous>, transform_indices = @transform_2, window_bounds = array<i64: 16, 1>}, {pipeline_mode = #tpu.pipeline_mode<synchronous>, transform_indices = @transform_3, window_bounds = array<i64: 8, 144>}, {pipeline_mode = #tpu.pipeline_mode<synchronous>, transform_indices = @transform_4, window_bounds = array<i64: 8, 1>}, {pipeline_mode = #tpu.pipeline_mode<synchronous>, transform_indices = @transform_5, window_bounds = array<i64: 1, 256>}, {pipeline_mode = #tpu.pipeline_mode<synchronous>, transform_indices = @transform_6, window_bounds = array<i64: 1, 256>}, {transform_indices = @transform_7, window_bounds = array<i64: 1, 8, 256>}]} {
    %cst = arith.constant 0.000000e+00 : bf16
    %0 = vector.broadcast %cst : bf16 to vector<16x128xbf16>
    %c0 = arith.constant 0 : index
    %c0_0 = arith.constant 0 : index
    %1 = vector.load %arg9[%c0, %c0_0] : memref<16x512xbf16, #tpu.memory_space<vmem>>, vector<16x128xbf16>
    tpu.vector_store %arg9[%c0, %c0_0], %0 {strides = array<i32>} : memref<16x512xbf16, #tpu.memory_space<vmem>>, vector<16x128xbf16>,
    %cst_1 = arith.constant 0.000000e+00 : bf16
    %2 = vector.broadcast %cst_1 : bf16 to vector<16x128xbf16>
    %c0_2 = arith.constant 0 : index
    %c384 = arith.constant 384 : index
    %3 = vector.load %arg9[%c0_2, %c384] : memref<16x512xbf16, #tpu.memory_space<vmem>>, vector<16x128xbf16>
    tpu.vector_store %arg9[%c0_2, %c384], %2 {strides = array<i32>} : memref<16x512xbf16, #tpu.memory_space<vmem>>, vector<16x128xbf16>,
    %cst_3 = arith.constant 0.000000e+00 : bf16
    %4 = vector.broadcast %cst_3 : bf16 to vector<16x128xbf16>
    %c0_4 = arith.constant 0 : index
    %c0_5 = arith.constant 0 : index
    %5 = vector.load %arg10[%c0_4, %c0_5] : memref<16x512xbf16, #tpu.memory_space<vmem>>, vector<16x128xbf16>
    tpu.vector_store %arg10[%c0_4, %c0_5], %4 {strides = array<i32>} : memref<16x512xbf16, #tpu.memory_space<vmem>>, vector<16x128xbf16>,
    %cst_6 = arith.constant 0.000000e+00 : bf16
    %6 = vector.broadcast %cst_6 : bf16 to vector<16x128xbf16>
    %c0_7 = arith.constant 0 : index
    %c384_8 = arith.constant 384 : index
    %7 = vector.load %arg10[%c0_7, %c384_8] : memref<16x512xbf16, #tpu.memory_space<vmem>>, vector<16x128xbf16>
    tpu.vector_store %arg10[%c0_7, %c384_8], %6 {strides = array<i32>} : memref<16x512xbf16, #tpu.memory_space<vmem>>, vector<16x128xbf16>,
    %c0_9 = arith.constant 0 : index
    %c0_10 = arith.constant 0 : index
    %8 = vector.load %arg6[%c0_9, %c0_10] : memref<1x256xf32, #tpu.memory_space<vmem>>, vector<1x256xf32>
    %c0_11 = arith.constant 0 : index
    %c0_12 = arith.constant 0 : index
    %9 = vector.load %arg7[%c0_11, %c0_12] : memref<1x256xf32, #tpu.memory_space<vmem>>, vector<1x256xf32>
    %c0_13 = arith.constant 0 : index
    %c0_14 = arith.constant 0 : index
    %10 = vector.load %arg2[%c0_13, %c0_14] : memref<16x144xbf16, #tpu.memory_space<vmem>>, vector<16x144xbf16>
    %c0_15 = arith.constant 0 : index
    %c0_16 = arith.constant 0 : index
    %11 = vector.load %arg4[%c0_15, %c0_16] : memref<8x144xbf16, #tpu.memory_space<vmem>>, vector<8x144xbf16>
    %c0_17 = arith.constant 0 : index
    %c0_18 = arith.constant 0 : index
    %12 = vector.load %arg3[%c0_17, %c0_18] : memref<16x1xf32, #tpu.memory_space<vmem>>, vector<16x1xf32>
    %c0_19 = arith.constant 0 : index
    %c0_20 = arith.constant 0 : index
    %13 = vector.load %arg5[%c0_19, %c0_20] : memref<8x1xf32, #tpu.memory_space<vmem>>, vector<8x1xf32>
    %c0_i32 = arith.constant 0 : i32
    %14 = arith.index_cast %c0_i32 : i32 to index
    %c0_21 = arith.constant 0 : index
    %c0_22 = arith.constant 0 : index
    %15 = vector.load %arg1[%14, %c0_21, %c0_22] : memref<1x16x256xbf16, #tpu.memory_space<vmem>>, vector<1x16x256xbf16>
    %16 = vector.shape_cast %15 : vector<1x16x256xbf16> to vector<16x256xbf16>
    %c0_23 = arith.constant 0 : index
    %c128 = arith.constant 128 : index
    %17 = vector.load %arg9[%c0_23, %c128] : memref<16x512xbf16, #tpu.memory_space<vmem>>, vector<16x256xbf16>
    tpu.vector_store %arg9[%c0_23, %c128], %16 {strides = array<i32>} : memref<16x512xbf16, #tpu.memory_space<vmem>>, vector<16x256xbf16>,
    %c0_24 = arith.constant 0 : index
    %c111 = arith.constant 111 : index
    %18 = vector.load %arg9[%c0_24, %c111] : memref<16x512xbf16, #tpu.memory_space<vmem>>, vector<16x256xbf16>
    %19 = arith.extf %18 : vector<16x256xbf16> to vector<16x256xf32>
    %20 = vector.broadcast %8 : vector<1x256xf32> to vector<16x256xf32>
    %21 = arith.mulf %19, %20 : vector<16x256xf32>
    %22 = arith.truncf %21 : vector<16x256xf32> to vector<16x256xbf16>
    %c0_25 = arith.constant 0 : index
    %c0_26 = arith.constant 0 : index
    %23 = vector.load %arg11[%c0_25, %c0_26] : memref<144x256xbf16, #tpu.memory_space<vmem>>, vector<16x256xbf16>
    tpu.vector_store %arg11[%c0_25, %c0_26], %22 {strides = array<i32>} : memref<144x256xbf16, #tpu.memory_space<vmem>>, vector<16x256xbf16>,
    %c0_27 = arith.constant 0 : index
    %c112 = arith.constant 112 : index
    %24 = vector.load %arg9[%c0_27, %c112] : memref<16x512xbf16, #tpu.memory_space<vmem>>, vector<16x256xbf16>
    %c16 = arith.constant 16 : index
    %c0_28 = arith.constant 0 : index
    %25 = vector.load %arg11[%c16, %c0_28] : memref<144x256xbf16, #tpu.memory_space<vmem>>, vector<16x256xbf16>
    tpu.vector_store %arg11[%c16, %c0_28], %24 {strides = array<i32>} : memref<144x256xbf16, #tpu.memory_space<vmem>>, vector<16x256xbf16>,
    %c0_29 = arith.constant 0 : index
    %c113 = arith.constant 113 : index
    %26 = vector.load %arg9[%c0_29, %c113] : memref<16x512xbf16, #tpu.memory_space<vmem>>, vector<16x256xbf16>
    %27 = arith.extf %26 : vector<16x256xbf16> to vector<16x256xf32>
    %28 = vector.broadcast %9 : vector<1x256xf32> to vector<16x256xf32>
    %29 = arith.mulf %27, %28 : vector<16x256xf32>
    %30 = arith.truncf %29 : vector<16x256xf32> to vector<16x256xbf16>
    %c32 = arith.constant 32 : index
    %c0_30 = arith.constant 0 : index
    %31 = vector.load %arg11[%c32, %c0_30] : memref<144x256xbf16, #tpu.memory_space<vmem>>, vector<16x256xbf16>
    tpu.vector_store %arg11[%c32, %c0_30], %30 {strides = array<i32>} : memref<144x256xbf16, #tpu.memory_space<vmem>>, vector<16x256xbf16>,
    %c0_31 = arith.constant 0 : index
    %c127 = arith.constant 127 : index
    %32 = vector.load %arg9[%c0_31, %c127] : memref<16x512xbf16, #tpu.memory_space<vmem>>, vector<16x256xbf16>
    %33 = arith.extf %32 : vector<16x256xbf16> to vector<16x256xf32>
    %34 = vector.broadcast %8 : vector<1x256xf32> to vector<16x256xf32>
    %35 = arith.mulf %33, %34 : vector<16x256xf32>
    %36 = arith.truncf %35 : vector<16x256xf32> to vector<16x256xbf16>
    %c48 = arith.constant 48 : index
    %c0_32 = arith.constant 0 : index
    %37 = vector.load %arg11[%c48, %c0_32] : memref<144x256xbf16, #tpu.memory_space<vmem>>, vector<16x256xbf16>
    tpu.vector_store %arg11[%c48, %c0_32], %36 {strides = array<i32>} : memref<144x256xbf16, #tpu.memory_space<vmem>>, vector<16x256xbf16>,
    %c0_33 = arith.constant 0 : index
    %c128_34 = arith.constant 128 : index
    %38 = vector.load %arg9[%c0_33, %c128_34] : memref<16x512xbf16, #tpu.memory_space<vmem>>, vector<16x256xbf16>
    %c64 = arith.constant 64 : index
    %c0_35 = arith.constant 0 : index
    %39 = vector.load %arg11[%c64, %c0_35] : memref<144x256xbf16, #tpu.memory_space<vmem>>, vector<16x256xbf16>
    tpu.vector_store %arg11[%c64, %c0_35], %38 {strides = array<i32>} : memref<144x256xbf16, #tpu.memory_space<vmem>>, vector<16x256xbf16>,
    %c0_36 = arith.constant 0 : index
    %c129 = arith.constant 129 : index
    %40 = vector.load %arg9[%c0_36, %c129] : memref<16x512xbf16, #tpu.memory_space<vmem>>, vector<16x256xbf16>
    %41 = arith.extf %40 : vector<16x256xbf16> to vector<16x256xf32>
    %42 = vector.broadcast %9 : vector<1x256xf32> to vector<16x256xf32>
    %43 = arith.mulf %41, %42 : vector<16x256xf32>
    %44 = arith.truncf %43 : vector<16x256xf32> to vector<16x256xbf16>
    %c80 = arith.constant 80 : index
    %c0_37 = arith.constant 0 : index
    %45 = vector.load %arg11[%c80, %c0_37] : memref<144x256xbf16, #tpu.memory_space<vmem>>, vector<16x256xbf16>
    tpu.vector_store %arg11[%c80, %c0_37], %44 {strides = array<i32>} : memref<144x256xbf16, #tpu.memory_space<vmem>>, vector<16x256xbf16>,
    %c0_38 = arith.constant 0 : index
    %c143 = arith.constant 143 : index
    %46 = vector.load %arg9[%c0_38, %c143] : memref<16x512xbf16, #tpu.memory_space<vmem>>, vector<16x256xbf16>
    %47 = arith.extf %46 : vector<16x256xbf16> to vector<16x256xf32>
    %48 = vector.broadcast %8 : vector<1x256xf32> to vector<16x256xf32>
    %49 = arith.mulf %47, %48 : vector<16x256xf32>
    %50 = arith.truncf %49 : vector<16x256xf32> to vector<16x256xbf16>
    %c96 = arith.constant 96 : index
    %c0_39 = arith.constant 0 : index
    %51 = vector.load %arg11[%c96, %c0_39] : memref<144x256xbf16, #tpu.memory_space<vmem>>, vector<16x256xbf16>
    tpu.vector_store %arg11[%c96, %c0_39], %50 {strides = array<i32>} : memref<144x256xbf16, #tpu.memory_space<vmem>>, vector<16x256xbf16>,
    %c0_40 = arith.constant 0 : index
    %c144 = arith.constant 144 : index
    %52 = vector.load %arg9[%c0_40, %c144] : memref<16x512xbf16, #tpu.memory_space<vmem>>, vector<16x256xbf16>
    %c112_41 = arith.constant 112 : index
    %c0_42 = arith.constant 0 : index
    %53 = vector.load %arg11[%c112_41, %c0_42] : memref<144x256xbf16, #tpu.memory_space<vmem>>, vector<16x256xbf16>
    tpu.vector_store %arg11[%c112_41, %c0_42], %52 {strides = array<i32>} : memref<144x256xbf16, #tpu.memory_space<vmem>>, vector<16x256xbf16>,
    %c0_43 = arith.constant 0 : index
    %c145 = arith.constant 145 : index
    %54 = vector.load %arg9[%c0_43, %c145] : memref<16x512xbf16, #tpu.memory_space<vmem>>, vector<16x256xbf16>
    %55 = arith.extf %54 : vector<16x256xbf16> to vector<16x256xf32>
    %56 = vector.broadcast %9 : vector<1x256xf32> to vector<16x256xf32>
    %57 = arith.mulf %55, %56 : vector<16x256xf32>
    %58 = arith.truncf %57 : vector<16x256xf32> to vector<16x256xbf16>
    %c128_44 = arith.constant 128 : index
    %c0_45 = arith.constant 0 : index
    %59 = vector.load %arg11[%c128_44, %c0_45] : memref<144x256xbf16, #tpu.memory_space<vmem>>, vector<16x256xbf16>
    tpu.vector_store %arg11[%c128_44, %c0_45], %58 {strides = array<i32>} : memref<144x256xbf16, #tpu.memory_space<vmem>>, vector<16x256xbf16>,
    %c0_46 = arith.constant 0 : index
    %c0_47 = arith.constant 0 : index
    %60 = vector.load %arg11[%c0_46, %c0_47] : memref<144x256xbf16, #tpu.memory_space<vmem>>, vector<144x256xbf16>
    %cst_48 = arith.constant dense<0.000000e+00> : vector<16x256xf32>
    %61 = tpu.matmul %10, %60, %cst_48 {dimension_numbers = #tpu.dot_dimension_numbers<[1], [0], [0], [1], [0, 0, 1, 1], [], []>} : vector<16x144xbf16>, vector<144x256xbf16>, vector<16x256xf32> -> vector<16x256xf32>
    %62 = vector.broadcast %12 : vector<16x1xf32> to vector<16x256xf32>
    %63 = arith.addf %61, %62 : vector<16x256xf32>
    %cst_49 = arith.constant 0.000000e+00 : f32
    %64 = vector.broadcast %cst_49 : f32 to vector<16x256xf32>
    %65 = arith.maximumf %63, %64 : vector<16x256xf32>
    %66 = arith.truncf %65 : vector<16x256xf32> to vector<16x256xbf16>
    %c0_50 = arith.constant 0 : index
    %c128_51 = arith.constant 128 : index
    %67 = vector.load %arg10[%c0_50, %c128_51] : memref<16x512xbf16, #tpu.memory_space<vmem>>, vector<16x256xbf16>
    tpu.vector_store %arg10[%c0_50, %c128_51], %66 {strides = array<i32>} : memref<16x512xbf16, #tpu.memory_space<vmem>>, vector<16x256xbf16>,
    %c0_52 = arith.constant 0 : index
    %c111_53 = arith.constant 111 : index
    %68 = vector.load %arg10[%c0_52, %c111_53] : memref<16x512xbf16, #tpu.memory_space<vmem>>, vector<16x256xbf16>
    %69 = arith.extf %68 : vector<16x256xbf16> to vector<16x256xf32>
    %70 = vector.broadcast %8 : vector<1x256xf32> to vector<16x256xf32>
    %71 = arith.mulf %69, %70 : vector<16x256xf32>
    %72 = arith.truncf %71 : vector<16x256xf32> to vector<16x256xbf16>
    %c0_54 = arith.constant 0 : index
    %c0_55 = arith.constant 0 : index
    %73 = vector.load %arg12[%c0_54, %c0_55] : memref<144x256xbf16, #tpu.memory_space<vmem>>, vector<16x256xbf16>
    tpu.vector_store %arg12[%c0_54, %c0_55], %72 {strides = array<i32>} : memref<144x256xbf16, #tpu.memory_space<vmem>>, vector<16x256xbf16>,
    %c0_56 = arith.constant 0 : index
    %c112_57 = arith.constant 112 : index
    %74 = vector.load %arg10[%c0_56, %c112_57] : memref<16x512xbf16, #tpu.memory_space<vmem>>, vector<16x256xbf16>
    %c16_58 = arith.constant 16 : index
    %c0_59 = arith.constant 0 : index
    %75 = vector.load %arg12[%c16_58, %c0_59] : memref<144x256xbf16, #tpu.memory_space<vmem>>, vector<16x256xbf16>
    tpu.vector_store %arg12[%c16_58, %c0_59], %74 {strides = array<i32>} : memref<144x256xbf16, #tpu.memory_space<vmem>>, vector<16x256xbf16>,
    %c0_60 = arith.constant 0 : index
    %c113_61 = arith.constant 113 : index
    %76 = vector.load %arg10[%c0_60, %c113_61] : memref<16x512xbf16, #tpu.memory_space<vmem>>, vector<16x256xbf16>
    %77 = arith.extf %76 : vector<16x256xbf16> to vector<16x256xf32>
    %78 = vector.broadcast %9 : vector<1x256xf32> to vector<16x256xf32>
    %79 = arith.mulf %77, %78 : vector<16x256xf32>
    %80 = arith.truncf %79 : vector<16x256xf32> to vector<16x256xbf16>
    %c32_62 = arith.constant 32 : index
    %c0_63 = arith.constant 0 : index
    %81 = vector.load %arg12[%c32_62, %c0_63] : memref<144x256xbf16, #tpu.memory_space<vmem>>, vector<16x256xbf16>
    tpu.vector_store %arg12[%c32_62, %c0_63], %80 {strides = array<i32>} : memref<144x256xbf16, #tpu.memory_space<vmem>>, vector<16x256xbf16>,
    %c0_64 = arith.constant 0 : index
    %c127_65 = arith.constant 127 : index
    %82 = vector.load %arg10[%c0_64, %c127_65] : memref<16x512xbf16, #tpu.memory_space<vmem>>, vector<16x256xbf16>
    %83 = arith.extf %82 : vector<16x256xbf16> to vector<16x256xf32>
    %84 = vector.broadcast %8 : vector<1x256xf32> to vector<16x256xf32>
    %85 = arith.mulf %83, %84 : vector<16x256xf32>
    %86 = arith.truncf %85 : vector<16x256xf32> to vector<16x256xbf16>
    %c48_66 = arith.constant 48 : index
    %c0_67 = arith.constant 0 : index
    %87 = vector.load %arg12[%c48_66, %c0_67] : memref<144x256xbf16, #tpu.memory_space<vmem>>, vector<16x256xbf16>
    tpu.vector_store %arg12[%c48_66, %c0_67], %86 {strides = array<i32>} : memref<144x256xbf16, #tpu.memory_space<vmem>>, vector<16x256xbf16>,
    %c0_68 = arith.constant 0 : index
    %c128_69 = arith.constant 128 : index
    %88 = vector.load %arg10[%c0_68, %c128_69] : memref<16x512xbf16, #tpu.memory_space<vmem>>, vector<16x256xbf16>
    %c64_70 = arith.constant 64 : index
    %c0_71 = arith.constant 0 : index
    %89 = vector.load %arg12[%c64_70, %c0_71] : memref<144x256xbf16, #tpu.memory_space<vmem>>, vector<16x256xbf16>
    tpu.vector_store %arg12[%c64_70, %c0_71], %88 {strides = array<i32>} : memref<144x256xbf16, #tpu.memory_space<vmem>>, vector<16x256xbf16>,
    %c0_72 = arith.constant 0 : index
    %c129_73 = arith.constant 129 : index
    %90 = vector.load %arg10[%c0_72, %c129_73] : memref<16x512xbf16, #tpu.memory_space<vmem>>, vector<16x256xbf16>
    %91 = arith.extf %90 : vector<16x256xbf16> to vector<16x256xf32>
    %92 = vector.broadcast %9 : vector<1x256xf32> to vector<16x256xf32>
    %93 = arith.mulf %91, %92 : vector<16x256xf32>
    %94 = arith.truncf %93 : vector<16x256xf32> to vector<16x256xbf16>
    %c80_74 = arith.constant 80 : index
    %c0_75 = arith.constant 0 : index
    %95 = vector.load %arg12[%c80_74, %c0_75] : memref<144x256xbf16, #tpu.memory_space<vmem>>, vector<16x256xbf16>
    tpu.vector_store %arg12[%c80_74, %c0_75], %94 {strides = array<i32>} : memref<144x256xbf16, #tpu.memory_space<vmem>>, vector<16x256xbf16>,
    %c0_76 = arith.constant 0 : index
    %c143_77 = arith.constant 143 : index
    %96 = vector.load %arg10[%c0_76, %c143_77] : memref<16x512xbf16, #tpu.memory_space<vmem>>, vector<16x256xbf16>
    %97 = arith.extf %96 : vector<16x256xbf16> to vector<16x256xf32>
    %98 = vector.broadcast %8 : vector<1x256xf32> to vector<16x256xf32>
    %99 = arith.mulf %97, %98 : vector<16x256xf32>
    %100 = arith.truncf %99 : vector<16x256xf32> to vector<16x256xbf16>
    %c96_78 = arith.constant 96 : index
    %c0_79 = arith.constant 0 : index
    %101 = vector.load %arg12[%c96_78, %c0_79] : memref<144x256xbf16, #tpu.memory_space<vmem>>, vector<16x256xbf16>
    tpu.vector_store %arg12[%c96_78, %c0_79], %100 {strides = array<i32>} : memref<144x256xbf16, #tpu.memory_space<vmem>>, vector<16x256xbf16>,
    %c0_80 = arith.constant 0 : index
    %c144_81 = arith.constant 144 : index
    %102 = vector.load %arg10[%c0_80, %c144_81] : memref<16x512xbf16, #tpu.memory_space<vmem>>, vector<16x256xbf16>
    %c112_82 = arith.constant 112 : index
    %c0_83 = arith.constant 0 : index
    %103 = vector.load %arg12[%c112_82, %c0_83] : memref<144x256xbf16, #tpu.memory_space<vmem>>, vector<16x256xbf16>
    tpu.vector_store %arg12[%c112_82, %c0_83], %102 {strides = array<i32>} : memref<144x256xbf16, #tpu.memory_space<vmem>>, vector<16x256xbf16>,
    %c0_84 = arith.constant 0 : index
    %c145_85 = arith.constant 145 : index
    %104 = vector.load %arg10[%c0_84, %c145_85] : memref<16x512xbf16, #tpu.memory_space<vmem>>, vector<16x256xbf16>
    %105 = arith.extf %104 : vector<16x256xbf16> to vector<16x256xf32>
    %106 = vector.broadcast %9 : vector<1x256xf32> to vector<16x256xf32>
    %107 = arith.mulf %105, %106 : vector<16x256xf32>
    %108 = arith.truncf %107 : vector<16x256xf32> to vector<16x256xbf16>
    %c128_86 = arith.constant 128 : index
    %c0_87 = arith.constant 0 : index
    %109 = vector.load %arg12[%c128_86, %c0_87] : memref<144x256xbf16, #tpu.memory_space<vmem>>, vector<16x256xbf16>
    tpu.vector_store %arg12[%c128_86, %c0_87], %108 {strides = array<i32>} : memref<144x256xbf16, #tpu.memory_space<vmem>>, vector<16x256xbf16>,
    %c0_88 = arith.constant 0 : index
    %c0_89 = arith.constant 0 : index
    %110 = vector.load %arg12[%c0_88, %c0_89] : memref<144x256xbf16, #tpu.memory_space<vmem>>, vector<144x256xbf16>
    %cst_90 = arith.constant dense<0.000000e+00> : vector<8x256xf32>
    %111 = tpu.matmul %11, %110, %cst_90 {dimension_numbers = #tpu.dot_dimension_numbers<[1], [0], [0], [1], [0, 0, 1, 1], [], []>} : vector<8x144xbf16>, vector<144x256xbf16>, vector<8x256xf32> -> vector<8x256xf32>
    %112 = vector.broadcast %13 : vector<8x1xf32> to vector<8x256xf32>
    %113 = arith.addf %111, %112 : vector<8x256xf32>
    %cst_91 = arith.constant 0.000000e+00 : f32
    %114 = vector.broadcast %cst_91 : f32 to vector<8x256xf32>
    %115 = arith.maximumf %113, %114 : vector<8x256xf32>
    %116 = arith.index_cast %c0_i32 : i32 to index
    %c0_92 = arith.constant 0 : index
    %c0_93 = arith.constant 0 : index
    %117 = vector.load %arg8[%116, %c0_92, %c0_93] : memref<1x8x256xf32, #tpu.memory_space<vmem>>, vector<1x8x256xf32>
    %118 = vector.shape_cast %117 : vector<1x8x256xf32> to vector<8x256xf32>
    %119 = vector.shape_cast %115 : vector<8x256xf32> to vector<1x8x256xf32>
    tpu.vector_store %arg8[%116, %c0_92, %c0_93], %119 {strides = array<i32>} : memref<1x8x256xf32, #tpu.memory_space<vmem>>, vector<1x8x256xf32>,
    %c1_i32 = arith.constant 1 : i32
    return
  }
  func.func @transform_0(%arg0: i32) -> (i32, i32, i32) {
    %c0_i32 = arith.constant 0 : i32
    %c0_i32_0 = arith.constant 0 : i32
    %c0_i32_1 = arith.constant 0 : i32
    return %arg0, %c0_i32, %c0_i32_0 : i32, i32, i32
  }
  func.func @transform_1(%arg0: i32) -> (i32, i32) {
    %c0_i32 = arith.constant 0 : i32
    %c0_i32_0 = arith.constant 0 : i32
    %c0_i32_1 = arith.constant 0 : i32
    return %c0_i32, %c0_i32_0 : i32, i32
  }
  func.func @transform_2(%arg0: i32) -> (i32, i32) {
    %c0_i32 = arith.constant 0 : i32
    %c0_i32_0 = arith.constant 0 : i32
    %c0_i32_1 = arith.constant 0 : i32
    return %c0_i32, %c0_i32_0 : i32, i32
  }
  func.func @transform_3(%arg0: i32) -> (i32, i32) {
    %c0_i32 = arith.constant 0 : i32
    %c0_i32_0 = arith.constant 0 : i32
    %c0_i32_1 = arith.constant 0 : i32
    return %c0_i32, %c0_i32_0 : i32, i32
  }
  func.func @transform_4(%arg0: i32) -> (i32, i32) {
    %c0_i32 = arith.constant 0 : i32
    %c0_i32_0 = arith.constant 0 : i32
    %c0_i32_1 = arith.constant 0 : i32
    return %c0_i32, %c0_i32_0 : i32, i32
  }
  func.func @transform_5(%arg0: i32) -> (i32, i32) {
    %c0_i32 = arith.constant 0 : i32
    %c0_i32_0 = arith.constant 0 : i32
    %c0_i32_1 = arith.constant 0 : i32
    return %c0_i32, %c0_i32_0 : i32, i32
  }
  func.func @transform_6(%arg0: i32) -> (i32, i32) {
    %c0_i32 = arith.constant 0 : i32
    %c0_i32_0 = arith.constant 0 : i32
    %c0_i32_1 = arith.constant 0 : i32
    return %c0_i32, %c0_i32_0 : i32, i32
  }
  func.func @transform_7(%arg0: i32) -> (i32, i32, i32) {
    %c0_i32 = arith.constant 0 : i32
    %c0_i32_0 = arith.constant 0 : i32
    %c0_i32_1 = arith.constant 0 : i32
    return %arg0, %c0_i32, %c0_i32_0 : i32, i32, i32
  }
}

</mosaic_0001>

<llo_original>
// kernel: doble_conv_forward.1
$region0: #{doble_conv_forward.1}
  #allocation0 [shape = 'u32[]', space=smem, size = 0x4, offset = 0x4, fixed_abs, tag = 'smem constant byte address 0x4 - core index']
  #allocation1 [shape = 'u32[144,128]{1,0:T(1,128)}', space=vmem, size = 0x12000, scoped, tag = 'internal scratch']
  #allocation2 [shape = 'bf16[16,512]{1,0:T(16,128)(2,1)}', space=vmem, size = 0x4000, scoped, tag = 'scratch operand']
  #allocation3 [shape = 'bf16[16,512]{1,0:T(16,128)(2,1)}', space=vmem, size = 0x4000, scoped, tag = 'scratch operand']
  #allocation4 [shape = 'bf16[144,256]{1,0:T(16,128)(2,1)}', space=vmem, size = 0x12000, scoped, tag = 'scratch operand']
  #allocation5 [shape = 'bf16[144,256]{1,0:T(16,128)(2,1)}', space=vmem, size = 0x12000, scoped, tag = 'scratch operand']
  %s0 = inlined_call_operand.vmem [shape: bf16[2,16,256], index: 0, kind: input, shape index: {}]
  %s1 = inlined_call_operand.vmem [shape: bf16[16,144], index: 1, kind: input, shape index: {}]
  %s2 = inlined_call_operand.vmem [shape: f32[16,1], index: 2, kind: input, shape index: {}]
  %s3 = inlined_call_operand.vmem [shape: bf16[8,144], index: 3, kind: input, shape index: {}]
  %s4 = inlined_call_operand.vmem [shape: f32[8,1], index: 4, kind: input, shape index: {}]
  %s5 = inlined_call_operand.vmem [shape: f32[1,256], index: 5, kind: input, shape index: {}]
  %s6 = inlined_call_operand.vmem [shape: f32[1,256], index: 6, kind: input, shape index: {}]
  %s7 = inlined_call_operand.vmem [shape: f32[2,8,256], index: 7, kind: output, shape index: {}]
  %s8 = sld [smem:[#allocation0]]
  $region61: #{doble_conv_forward.1} parent=0
    _
  %s10 = ssub.s32 1, %s8
  %s11 = scalar_select 0, %s10, %s8
  loop: start=0, step=1, limit=4
  $region2: #{doble_conv_forward.1} parent=0 // loop_pre_header
    _
  $region3: #{doble_conv_forward.1} parent=0 // loop_header
    %s13 = sphi 0, %s17
    %p14 = scmp.ge.s32.totalorder %s13, 4
    %s23 = sphi 0, %s25
    %s26 = sphi 0, %s23
    %s27 = sphi 0, %s26
    %s43 = sphi 0, %s27
    %s47 = sphi 0, %s47
    %s49 = sphi 0, %s47
    %s50 = sphi 0, %s49
    %s64 = sphi 0, %s50
    %s68 = sphi 0, %s68
    %s70 = sphi 0, %s68
    %s71 = sphi 0, %s70
    %s85 = sphi 0, %s71
    %s89 = sphi 0, %s89
    %s91 = sphi 0, %s89
    %s92 = sphi 0, %s91
    %s106 = sphi 0, %s92
    %s110 = sphi 0, %s110
    %s112 = sphi 0, %s110
    %s113 = sphi 0, %s112
    %s127 = sphi 0, %s113
    %s131 = sphi 0, %s131
    %s133 = sphi 0, %s131
    %s134 = sphi 0, %s133
    %s148 = sphi 0, %s134
    %s152 = sphi 0, %s152
    %s154 = sphi 0, %s152
    %s155 = sphi 0, %s154
    %s169 = sphi 0, %s155
    %s175 = sphi 0, %s177
    %s178 = sphi 0, %s175
    %s179 = sphi 0, %s178
    %s195 = sphi 0, %s179
  $region4: #{doble_conv_forward.1} parent=0 // loop_header_branch
    %16 = sbr.rel (%p14) target = $region8
  $region5: #{doble_conv_forward.1} parent=0 // loop_body
    %s18 = ssub.s32 %s13, 1
    %s19 = ssub.s32 %s13, 2
    %s20 = sadd.s32 %s13, 1
    %s21 = ssub.s32 %s13, %s20
    %p22 = scmp.eq.s32.totalorder %s21, 0
    %s24 = sadd.s32 %s23, 1
    %s25 = scalar_select %p22, %s23, %s24
    %p28 = pneg %p22
    %p29 = scmp.eq.s32.totalorder %s13, 1
    %p30 = por %p28, %p29
    %p31 = scmp.ne.s32.totalorder %s23, %s26
    %p32 = scmp.eq.s32.totalorder %s13, 0
    %p33 = por %p31, %p32
    %p34 = scmp.ne.s32.totalorder %s23, %s26
    %p35 = scmp.eq.s32.totalorder %s18, 1
    %p36 = por %p34, %p35
    %p37 = scmp.ne.s32.totalorder %s26, %s27
    %p38 = scmp.eq.s32.totalorder %s18, 0
    %p39 = por %p37, %p38
    %p40 = scmp.ne.s32.totalorder %s26, %s27
    %p41 = scmp.eq.s32.totalorder %s19, 1
    %p42 = por %p40, %p41
    %p44 = scmp.ne.s32.totalorder %s27, %s43
    %p45 = scmp.eq.s32.totalorder %s19, 0
    %p46 = por %p44, %p45
    %s48 = sadd.s32 %s47, 1
    %p51 = scmp.eq.s32.totalorder %s13, 1
    %p52 = scmp.ne.s32.totalorder %s47, %s49
    %p53 = scmp.eq.s32.totalorder %s13, 0
    %p54 = por %p52, %p53
    %p55 = scmp.ne.s32.totalorder %s47, %s49
    %p56 = scmp.eq.s32.totalorder %s18, 1
    %p57 = por %p55, %p56
    %p58 = scmp.ne.s32.totalorder %s49, %s50
    %p59 = scmp.eq.s32.totalorder %s18, 0
    %p60 = por %p58, %p59
    %p61 = scmp.ne.s32.totalorder %s49, %s50
    %p62 = scmp.eq.s32.totalorder %s19, 1
    %p63 = por %p61, %p62
    %p65 = scmp.ne.s32.totalorder %s50, %s64
    %p66 = scmp.eq.s32.totalorder %s19, 0
    %p67 = por %p65, %p66
    %s69 = sadd.s32 %s68, 1
    %p72 = scmp.eq.s32.totalorder %s13, 1
    %p73 = scmp.ne.s32.totalorder %s68, %s70
    %p74 = scmp.eq.s32.totalorder %s13, 0
    %p75 = por %p73, %p74
    %p76 = scmp.ne.s32.totalorder %s68, %s70
    %p77 = scmp.eq.s32.totalorder %s18, 1
    %p78 = por %p76, %p77
    %p79 = scmp.ne.s32.totalorder %s70, %s71
    %p80 = scmp.eq.s32.totalorder %s18, 0
    %p81 = por %p79, %p80
    %p82 = scmp.ne.s32.totalorder %s70, %s71
    %p83 = scmp.eq.s32.totalorder %s19, 1
    %p84 = por %p82, %p83
    %p86 = scmp.ne.s32.totalorder %s71, %s85
    %p87 = scmp.eq.s32.totalorder %s19, 0
    %p88 = por %p86, %p87
    %s90 = sadd.s32 %s89, 1
    %p93 = scmp.eq.s32.totalorder %s13, 1
    %p94 = scmp.ne.s32.totalorder %s89, %s91
    %p95 = scmp.eq.s32.totalorder %s13, 0
    %p96 = por %p94, %p95
    %p97 = scmp.ne.s32.totalorder %s89, %s91
    %p98 = scmp.eq.s32.totalorder %s18, 1
    %p99 = por %p97, %p98
    %p100 = scmp.ne.s32.totalorder %s91, %s92
    %p101 = scmp.eq.s32.totalorder %s18, 0
    %p102 = por %p100, %p101
    %p103 = scmp.ne.s32.totalorder %s91, %s92
    %p104 = scmp.eq.s32.totalorder %s19, 1
    %p105 = por %p103, %p104
    %p107 = scmp.ne.s32.totalorder %s92, %s106
    %p108 = scmp.eq.s32.totalorder %s19, 0
    %p109 = por %p107, %p108
    %s111 = sadd.s32 %s110, 1
    %p114 = scmp.eq.s32.totalorder %s13, 1
    %p115 = scmp.ne.s32.totalorder %s110, %s112
    %p116 = scmp.eq.s32.totalorder %s13, 0
    %p117 = por %p115, %p116
    %p118 = scmp.ne.s32.totalorder %s110, %s112
    %p119 = scmp.eq.s32.totalorder %s18, 1
    %p120 = por %p118, %p119
    %p121 = scmp.ne.s32.totalorder %s112, %s113
    %p122 = scmp.eq.s32.totalorder %s18, 0
    %p123 = por %p121, %p122
    %p124 = scmp.ne.s32.totalorder %s112, %s113
    %p125 = scmp.eq.s32.totalorder %s19, 1
    %p126 = por %p124, %p125
    %p128 = scmp.ne.s32.totalorder %s113, %s127
    %p129 = scmp.eq.s32.totalorder %s19, 0
    %p130 = por %p128, %p129
    %s132 = sadd.s32 %s131, 1
    %p135 = scmp.eq.s32.totalorder %s13, 1
    %p136 = scmp.ne.s32.totalorder %s131, %s133
    %p137 = scmp.eq.s32.totalorder %s13, 0
    %p138 = por %p136, %p137
    %p139 = scmp.ne.s32.totalorder %s131, %s133
    %p140 = scmp.eq.s32.totalorder %s18, 1
    %p141 = por %p139, %p140
    %p142 = scmp.ne.s32.totalorder %s133, %s134
    %p143 = scmp.eq.s32.totalorder %s18, 0
    %p144 = por %p142, %p143
    %p145 = scmp.ne.s32.totalorder %s133, %s134
    %p146 = scmp.eq.s32.totalorder %s19, 1
    %p147 = por %p145, %p146
    %p149 = scmp.ne.s32.totalorder %s134, %s148
    %p150 = scmp.eq.s32.totalorder %s19, 0
    %p151 = por %p149, %p150
    %s153 = sadd.s32 %s152, 1
    %p156 = scmp.eq.s32.totalorder %s13, 1
    %p157 = scmp.ne.s32.totalorder %s152, %s154
    %p158 = scmp.eq.s32.totalorder %s13, 0
    %p159 = por %p157, %p158
    %p160 = scmp.ne.s32.totalorder %s152, %s154
    %p161 = scmp.eq.s32.totalorder %s18, 1
    %p162 = por %p160, %p161
    %p163 = scmp.ne.s32.totalorder %s154, %s155
    %p164 = scmp.eq.s32.totalorder %s18, 0
    %p165 = por %p163, %p164
    %p166 = scmp.ne.s32.totalorder %s154, %s155
    %p167 = scmp.eq.s32.totalorder %s19, 1
    %p168 = por %p166, %p167
    %p170 = scmp.ne.s32.totalorder %s155, %s169
    %p171 = scmp.eq.s32.totalorder %s19, 0
    %p172 = por %p170, %p171
    %s173 = ssub.s32 %s13, %s20
    %p174 = scmp.eq.s32.totalorder %s173, 0
    %s176 = sadd.s32 %s175, 1
    %s177 = scalar_select %p174, %s175, %s176
    %p180 = pneg %p174
    %p181 = scmp.eq.s32.totalorder %s13, 1
    %p182 = por %p180, %p181
    %p183 = scmp.ne.s32.totalorder %s175, %s178
    %p184 = scmp.eq.s32.totalorder %s13, 0
    %p185 = por %p183, %p184
    %p186 = scmp.ne.s32.totalorder %s175, %s178
    %p187 = scmp.eq.s32.totalorder %s18, 1
    %p188 = por %p186, %p187
    %p189 = scmp.ne.s32.totalorder %s178, %s179
    %p190 = scmp.eq.s32.totalorder %s18, 0
    %p191 = por %p189, %p190
    %p192 = scmp.ne.s32.totalorder %s178, %s179
    %p193 = scmp.eq.s32.totalorder %s19, 1
    %p194 = por %p192, %p193
    %p196 = scmp.ne.s32.totalorder %s179, %s195
    %p197 = scmp.eq.s32.totalorder %s19, 0
    %p198 = por %p196, %p197
    %p199 = scmp.le.s32.totalorder 1, %s13
    %p200 = scmp.lt.s32.totalorder %s13, 3
    %p201 = pnand %p199, %p200
    %p202 = pneg %p201
    // Predicated region
    $region9: #{doble_conv_forward.1} parent=5 // pred_check
      _
    $region10: #{doble_conv_forward.1} parent=5 // pred_check_branch
      %204 = sbr.rel (%p201) target = $region12
    $region11: #{doble_conv_forward.1} parent=5 // pred_region
      %s205 = ssub.s32 %s13, 1
      // Predicated region
      $region13: #{doble_conv_forward.1} parent=11 // pred_check
        %p206 = pneg %p60
      $region14: #{doble_conv_forward.1} parent=11 // pred_check_branch
        %208 = sbr.rel (%p206) target = $region16
      $region15: #{doble_conv_forward.1} parent=11 // pred_region
        _
      $region16: #{doble_conv_forward.1} parent=11 // pred_fallthru
        _
      // Predicated region
      $region17: #{doble_conv_forward.1} parent=11 // pred_check
        %p209 = pneg %p81
      $region18: #{doble_conv_forward.1} parent=11 // pred_check_branch
        %211 = sbr.rel (%p209) target = $region20
      $region19: #{doble_conv_forward.1} parent=11 // pred_region
        _
      $region20: #{doble_conv_forward.1} parent=11 // pred_fallthru
        _
      // Predicated region
      $region21: #{doble_conv_forward.1} parent=11 // pred_check
        %p212 = pneg %p102
      $region22: #{doble_conv_forward.1} parent=11 // pred_check_branch
        %214 = sbr.rel (%p212) target = $region24
      $region23: #{doble_conv_forward.1} parent=11 // pred_region
        _
      $region24: #{doble_conv_forward.1} parent=11 // pred_fallthru
        _
      // Predicated region
      $region25: #{doble_conv_forward.1} parent=11 // pred_check
        %p215 = pneg %p123
      $region26: #{doble_conv_forward.1} parent=11 // pred_check_branch
        %217 = sbr.rel (%p215) target = $region28
      $region27: #{doble_conv_forward.1} parent=11 // pred_region
        _
      $region28: #{doble_conv_forward.1} parent=11 // pred_fallthru
        _
      // Predicated region
      $region29: #{doble_conv_forward.1} parent=11 // pred_check
        %p218 = pneg %p144
      $region30: #{doble_conv_forward.1} parent=11 // pred_check_branch
        %220 = sbr.rel (%p218) target = $region32
      $region31: #{doble_conv_forward.1} parent=11 // pred_region
        _
      $region32: #{doble_conv_forward.1} parent=11 // pred_fallthru
        _
      // Predicated region
      $region33: #{doble_conv_forward.1} parent=11 // pred_check
        %p221 = pneg %p165
      $region34: #{doble_conv_forward.1} parent=11 // pred_check_branch
        %223 = sbr.rel (%p221) target = $region36
      $region35: #{doble_conv_forward.1} parent=11 // pred_region
        _
      $region36: #{doble_conv_forward.1} parent=11 // pred_fallthru
        _
    $region12: #{doble_conv_forward.1} parent=5 // pred_fallthru
      _
    %p224 = scmp.lt.s32.totalorder %s13, 2
    // Predicated region
    $region37: #{doble_conv_forward.1} parent=5 // pred_check
      %p225 = pneg %p224
    $region38: #{doble_conv_forward.1} parent=5 // pred_check_branch
      %227 = sbr.rel (%p225) target = $region40
    $region39: #{doble_conv_forward.1} parent=5 // pred_region
      // Predicated region
      $region41: #{doble_conv_forward.1} parent=39 // pred_check
        %p228 = pneg %p33
      $region42: #{doble_conv_forward.1} parent=39 // pred_check_branch
        %230 = sbr.rel (%p228) target = $region44
      $region43: #{doble_conv_forward.1} parent=39 // pred_region
        %p231 = scmp.lt.s32.totalorder %s13, 1
        %s232 = scalar_select %p231, %s13, 1
        %s233 = smul.addr %s232, 4
        %s234 = smul.addr %s233, 4
        %s235 = scalar_lea.vmem %s0, %s234
      $region44: #{doble_conv_forward.1} parent=39 // pred_fallthru
        _
    $region40: #{doble_conv_forward.1} parent=5 // pred_fallthru
      _
    %p236 = scmp.le.s32.totalorder 1, %s13
    %p237 = scmp.lt.s32.totalorder %s13, 3
    %p238 = pnand %p236, %p237
    %p239 = pneg %p238
    // Predicated region
    $region45: #{doble_conv_forward.1} parent=5 // pred_check
      _
    $region46: #{doble_conv_forward.1} parent=5 // pred_check_branch
      %241 = sbr.rel (%p238) target = $region48
    $region47: #{doble_conv_forward.1} parent=5 // pred_region
      %s242 = ssub.s32 %s13, 1
      %p243 = scmp.lt.s32.totalorder %s18, 1
      %s244 = scalar_select %p243, %s18, 1
      %s245 = smul.addr %s244, 4
      %s246 = smul.addr %s245, 4
      %s247 = scalar_lea.vmem %s0, %s246
      %p248 = pneg %p39
      %p249 = pneg %p36
      %p250 = pneg %p60
      %p251 = pneg %p57
      %p252 = pneg %p81
      %p253 = pneg %p78
      %p254 = pneg %p102
      %p255 = pneg %p99
      %p256 = pneg %p123
      %p257 = pneg %p120
      %p258 = pneg %p144
      %p259 = pneg %p141
      %p260 = pneg %p165
      %p261 = pneg %p162
      %p262 = pneg %p191
      %p263 = pneg %p188
      %p264 = scmp.lt.s32.totalorder %s18, 1
      %s265 = scalar_select %p264, %s18, 1
      %s266 = smul.addr %s265, 2
      %s267 = smul.addr %s266, 8
      %s268 = scalar_lea.vmem %s7, %s267
      %p269 = scmp.lt.s32.totalorder %s18, 1
      %s270 = scalar_select %p269, %s18, 1
      %s271 = smul.addr %s270, 4
      %s272 = smul.addr %s271, 4
      %s273 = scalar_lea.vmem %s0, %s272
      %p274 = scmp.lt.s32.totalorder %s18, 1
      %s275 = scalar_select %p274, %s18, 1
      %s276 = smul.addr %s275, 2
      %s277 = smul.addr %s276, 8
      %s278 = scalar_lea.vmem %s7, %s277
      %280 = vst [vmem:[#allocation2] sm:$0xff] 0
      %281 = vst [vmem:[#allocation2 + $0x18] sm:$0xff] 0
      %282 = vst [vmem:[#allocation3] sm:$0xff] 0
      %283 = vst [vmem:[#allocation3 + $0x18] sm:$0xff] 0
      %v284 = vld [vmem:[%s5] sm:$0x3]
      %v285 = vld [vmem:[%s6] sm:$0x3]
      %v286 = vld [vmem:[%s1] sm:$0xff]
      %v287 = vld [vmem:[%s1 + $0x8] sm:$0xff]
      %v288 = vld [vmem:[%s3] sm:$0xff]
      %v289 = vld [vmem:[%s2] sm:$0xff]
      %v290 = vld [vmem:[%s2 + $0x8] sm:$0xff]
      %v291 = vld [vmem:[%s4] sm:$0xff]
      %v292 = vld [vmem:[%s273] sm:$0xff]
      %v293 = vld [vmem:[%s273 + $0x8] sm:$0xff]
      %v296 = vunpack.c.l.b16 %v292
      %v297 = vunpack.c.h.b16 %v292
      %v298 = vunpack.c.l.b16 %v293
      %v299 = vunpack.c.h.b16 %v293
      %v300 = vpack.c.b16 %v298, %v296
      %v301 = vpack.c.b16 %v299, %v297
      %304 = vst [vmem:[#allocation2 + $0x8] sm:$0xff] %v300
      %305 = vst [vmem:[#allocation2 + $0x10] sm:$0xff] %v301
      %v306 = vld [vmem:[#allocation2] sm:$0xff]
      %v307 = vld [vmem:[#allocation2 + $0x8] sm:$0xff]
      %v308 = vld [vmem:[#allocation2 + $0x10] sm:$0xff]
      %v309 = vunpack.c.l.bf16 %v306
      %v310 = vunpack.c.l.bf16 %v307
      %v311 = vunpack.c.l.bf16 %v308
      %v312 = vunpack.c.h.bf16 %v306
      %v313 = vunpack.c.h.bf16 %v307
      %v314 = vunpack.c.h.bf16 %v308
      %v316 = vlaneseq
      %v317 = vshrl.u32 %v316, 7
      %v318 = vsub.s32 0, %v317
      %v319 = vrot.slane %v284, %v318
      %v320 = vlaneseq
      %v321 = vshrl.u32 %v320, 7
      %v322 = vsub.s32 1, %v321
      %v323 = vrot.slane %v284, %v322
      %324 = vrot.lane.b32.xlu0 %v319, 111
      %v325 = vpop.permute.xlu0 %324
      %326 = vrot.lane.b32.xlu0 %v323, 111
      %v327 = vpop.permute.xlu0 %326
      %vm328 = vcmask 908288
      %v329 = vsel %vm328, %v325, %v327
      %v333 = vmul.f32 %v309, %v325
      %v334 = vmul.f32 %v310, %v329
      %v335 = vmul.f32 %v311, %v327
      %v336 = vmul.f32 %v312, %v325
      %v337 = vmul.f32 %v313, %v329
      %v338 = vmul.f32 %v314, %v327
      %v339 = vpack.c.bf16 %v336, %v333
      %v340 = vpack.c.bf16 %v337, %v334
      %v341 = vpack.c.bf16 %v338, %v335
      %345 = vrot.lane.b32.xlu0 %v339, 17
      %v346 = vpop.permute.xlu0 %345
      %347 = vrot.lane.b32.xlu0 %v340, 17
      %v348 = vpop.permute.xlu0 %347
      %349 = vrot.lane.b32.xlu0 %v341, 17
      %v350 = vpop.permute.xlu0 %349
      %vm351 = vcmask 138240
      %v352 = vsel %vm351, %v346, %v348
      %v353 = vsel %vm351, %v348, %v350
      %356 = vst [vmem:[#allocation4] sm:$0xff] %v352
      %357 = vst [vmem:[#allocation4 + $0x8] sm:$0xff] %v353
      %v358 = vld [vmem:[#allocation2] sm:$0xff]
      %v359 = vld [vmem:[#allocation2 + $0x8] sm:$0xff]
      %v360 = vld [vmem:[#allocation2 + $0x10] sm:$0xff]
      %364 = vrot.lane.b32.xlu0 %v358, 16
      %v365 = vpop.permute.xlu0 %364
      %366 = vrot.lane.b32.xlu0 %v359, 16
      %v367 = vpop.permute.xlu0 %366
      %368 = vrot.lane.b32.xlu0 %v360, 16
      %v369 = vpop.permute.xlu0 %368
      %vm370 = vcmask 130048
      %v371 = vsel %vm370, %v365, %v367
      %v372 = vsel %vm370, %v367, %v369
      %375 = vst [vmem:[#allocation4 + $0x10] sm:$0xff] %v371
      %376 = vst [vmem:[#allocation4 + $0x18] sm:$0xff] %v372
      %v377 = vld [vmem:[#allocation2] sm:$0xff]
      %v378 = vld [vmem:[#allocation2 + $0x8] sm:$0xff]
      %v379 = vld [vmem:[#allocation2 + $0x10] sm:$0xff]
      %v380 = vunpack.c.l.bf16 %v377
      %v381 = vunpack.c.l.bf16 %v378
      %v382 = vunpack.c.l.bf16 %v379
      %v383 = vunpack.c.h.bf16 %v377
      %v384 = vunpack.c.h.bf16 %v378
      %v385 = vunpack.c.h.bf16 %v379
      %v387 = vlaneseq
      %v388 = vshrl.u32 %v387, 7
      %v389 = vsub.s32 0, %v388
      %v390 = vrot.slane %v285, %v389
      %v391 = vlaneseq
      %v392 = vshrl.u32 %v391, 7
      %v393 = vsub.s32 1, %v392
      %v394 = vrot.slane %v285, %v393
      %395 = vrot.lane.b32.xlu0 %v390, 113
      %v396 = vpop.permute.xlu0 %395
      %397 = vrot.lane.b32.xlu0 %v394, 113
      %v398 = vpop.permute.xlu0 %397
      %vm399 = vcmask 924672
      %v400 = vsel %vm399, %v396, %v398
      %v404 = vmul.f32 %v380, %v396
      %v405 = vmul.f32 %v381, %v400
      %v406 = vmul.f32 %v382, %v398
      %v407 = vmul.f32 %v383, %v396
      %v408 = vmul.f32 %v384, %v400
      %v409 = vmul.f32 %v385, %v398
      %v410 = vpack.c.bf16 %v407, %v404
      %v411 = vpack.c.bf16 %v408, %v405
      %v412 = vpack.c.bf16 %v409, %v406
      %416 = vrot.lane.b32.xlu0 %v410, 15
      %v417 = vpop.permute.xlu0 %416
      %418 = vrot.lane.b32.xlu0 %v411, 15
      %v419 = vpop.permute.xlu0 %418
      %420 = vrot.lane.b32.xlu0 %v412, 15
      %v421 = vpop.permute.xlu0 %420
      %vm422 = vcmask 121856
      %v423 = vsel %vm422, %v417, %v419
      %v424 = vsel %vm422, %v419, %v421
      %427 = vst [vmem:[#allocation4 + $0x20] sm:$0xff] %v423
      %428 = vst [vmem:[#allocation4 + $0x28] sm:$0xff] %v424
      %v429 = vld [vmem:[#allocation2] sm:$0xff]
      %v430 = vld [vmem:[#allocation2 + $0x8] sm:$0xff]
      %v431 = vld [vmem:[#allocation2 + $0x10] sm:$0xff]
      %v432 = vunpack.c.l.bf16 %v429
      %v433 = vunpack.c.l.bf16 %v430
      %v434 = vunpack.c.l.bf16 %v431
      %v435 = vunpack.c.h.bf16 %v429
      %v436 = vunpack.c.h.bf16 %v430
      %v437 = vunpack.c.h.bf16 %v431
      %438 = vrot.lane.b32.xlu0 %v319, 127
      %v439 = vpop.permute.xlu0 %438
      %440 = vrot.lane.b32.xlu0 %v323, 127
      %v441 = vpop.permute.xlu0 %440
      %vm442 = vcmask 1039360
      %v443 = vsel %vm442, %v439, %v441
      %v447 = vmul.f32 %v432, %v439
      %v448 = vmul.f32 %v433, %v443
      %v449 = vmul.f32 %v434, %v441
      %v450 = vmul.f32 %v435, %v439
      %v451 = vmul.f32 %v436, %v443
      %v452 = vmul.f32 %v437, %v441
      %v453 = vpack.c.bf16 %v450, %v447
      %v454 = vpack.c.bf16 %v451, %v448
      %v455 = vpack.c.bf16 %v452, %v449
      %459 = vrot.lane.b32.xlu0 %v453, 1
      %v460 = vpop.permute.xlu0 %459
      %461 = vrot.lane.b32.xlu0 %v454, 1
      %v462 = vpop.permute.xlu0 %461
      %463 = vrot.lane.b32.xlu0 %v455, 1
      %v464 = vpop.permute.xlu0 %463
      %vm465 = vcmask 7168
      %v466 = vsel %vm465, %v460, %v462
      %v467 = vsel %vm465, %v462, %v464
      %470 = vst [vmem:[#allocation4 + $0x30] sm:$0xff] %v466
      %471 = vst [vmem:[#allocation4 + $0x38] sm:$0xff] %v467
      %v472 = vld [vmem:[#allocation2 + $0x8] sm:$0xff]
      %v473 = vld [vmem:[#allocation2 + $0x10] sm:$0xff]
      %474 = vst [vmem:[#allocation4 + $0x40] sm:$0xff] %v472
      %475 = vst [vmem:[#allocation4 + $0x48] sm:$0xff] %v473
      %v476 = vld [vmem:[#allocation2 + $0x8] sm:$0xff]
      %v477 = vld [vmem:[#allocation2 + $0x10] sm:$0xff]
      %v478 = vld [vmem:[#allocation2 + $0x18] sm:$0xff]
      %v479 = vunpack.c.l.bf16 %v476
      %v480 = vunpack.c.l.bf16 %v477
      %v481 = vunpack.c.l.bf16 %v478
      %v482 = vunpack.c.h.bf16 %v476
      %v483 = vunpack.c.h.bf16 %v477
      %v484 = vunpack.c.h.bf16 %v478
      %485 = vrot.lane.b32.xlu0 %v390, 1
      %v486 = vpop.permute.xlu0 %485
      %487 = vrot.lane.b32.xlu0 %v394, 1
      %v488 = vpop.permute.xlu0 %487
      %vm489 = vcmask 7168
      %v490 = vsel %vm489, %v486, %v488
      %v494 = vmul.f32 %v479, %v486
      %v495 = vmul.f32 %v480, %v490
      %v496 = vmul.f32 %v481, %v488
      %v497 = vmul.f32 %v482, %v486
      %v498 = vmul.f32 %v483, %v490
      %v499 = vmul.f32 %v484, %v488
      %v500 = vpack.c.bf16 %v497, %v494
      %v501 = vpack.c.bf16 %v498, %v495
      %v502 = vpack.c.bf16 %v499, %v496
      %506 = vrot.lane.b32.xlu0 %v500, 127
      %v507 = vpop.permute.xlu0 %506
      %508 = vrot.lane.b32.xlu0 %v501, 127
      %v509 = vpop.permute.xlu0 %508
      %510 = vrot.lane.b32.xlu0 %v502, 127
      %v511 = vpop.permute.xlu0 %510
      %vm512 = vcmask 1039360
      %v513 = vsel %vm512, %v507, %v509
      %v514 = vsel %vm512, %v509, %v511
      %517 = vst [vmem:[#allocation4 + $0x50] sm:$0xff] %v513
      %518 = vst [vmem:[#allocation4 + $0x58] sm:$0xff] %v514
      %v519 = vld [vmem:[#allocation2 + $0x8] sm:$0xff]
      %v520 = vld [vmem:[#allocation2 + $0x10] sm:$0xff]
      %v521 = vld [vmem:[#allocation2 + $0x18] sm:$0xff]
      %v522 = vunpack.c.l.bf16 %v519
      %v523 = vunpack.c.l.bf16 %v520
      %v524 = vunpack.c.l.bf16 %v521
      %v525 = vunpack.c.h.bf16 %v519
      %v526 = vunpack.c.h.bf16 %v520
      %v527 = vunpack.c.h.bf16 %v521
      %528 = vrot.lane.b32.xlu0 %v319, 15
      %v529 = vpop.permute.xlu0 %528
      %530 = vrot.lane.b32.xlu0 %v323, 15
      %v531 = vpop.permute.xlu0 %530
      %vm532 = vcmask 121856
      %v533 = vsel %vm532, %v529, %v531
      %v537 = vmul.f32 %v522, %v529
      %v538 = vmul.f32 %v523, %v533
      %v539 = vmul.f32 %v524, %v531
      %v540 = vmul.f32 %v525, %v529
      %v541 = vmul.f32 %v526, %v533
      %v542 = vmul.f32 %v527, %v531
      %v543 = vpack.c.bf16 %v540, %v537
      %v544 = vpack.c.bf16 %v541, %v538
      %v545 = vpack.c.bf16 %v542, %v539
      %549 = vrot.lane.b32.xlu0 %v543, 113
      %v550 = vpop.permute.xlu0 %549
      %551 = vrot.lane.b32.xlu0 %v544, 113
      %v552 = vpop.permute.xlu0 %551
      %553 = vrot.lane.b32.xlu0 %v545, 113
      %v554 = vpop.permute.xlu0 %553
      %vm555 = vcmask 924672
      %v556 = vsel %vm555, %v550, %v552
      %v557 = vsel %vm555, %v552, %v554
      %560 = vst [vmem:[#allocation4 + $0x60] sm:$0xff] %v556
      %561 = vst [vmem:[#allocation4 + $0x68] sm:$0xff] %v557
      %v562 = vld [vmem:[#allocation2 + $0x8] sm:$0xff]
      %v563 = vld [vmem:[#allocation2 + $0x10] sm:$0xff]
      %v564 = vld [vmem:[#allocation2 + $0x18] sm:$0xff]
      %568 = vrot.lane.b32.xlu0 %v562, 112
      %v569 = vpop.permute.xlu0 %568
      %570 = vrot.lane.b32.xlu0 %v563, 112
      %v571 = vpop.permute.xlu0 %570
      %572 = vrot.lane.b32.xlu0 %v564, 112
      %v573 = vpop.permute.xlu0 %572
      %vm574 = vcmask 916480
      %v575 = vsel %vm574, %v569, %v571
      %v576 = vsel %vm574, %v571, %v573
      %579 = vst [vmem:[#allocation4 + $0x70] sm:$0xff] %v575
      %580 = vst [vmem:[#allocation4 + $0x78] sm:$0xff] %v576
      %v581 = vld [vmem:[#allocation2 + $0x8] sm:$0xff]
      %v582 = vld [vmem:[#allocation2 + $0x10] sm:$0xff]
      %v583 = vld [vmem:[#allocation2 + $0x18] sm:$0xff]
      %v584 = vunpack.c.l.bf16 %v581
      %v585 = vunpack.c.l.bf16 %v582
      %v586 = vunpack.c.l.bf16 %v583
      %v587 = vunpack.c.h.bf16 %v581
      %v588 = vunpack.c.h.bf16 %v582
      %v589 = vunpack.c.h.bf16 %v583
      %590 = vrot.lane.b32.xlu0 %v390, 17
      %v591 = vpop.permute.xlu0 %590
      %592 = vrot.lane.b32.xlu0 %v394, 17
      %v593 = vpop.permute.xlu0 %592
      %vm594 = vcmask 138240
      %v595 = vsel %vm594, %v591, %v593
      %v599 = vmul.f32 %v584, %v591
      %v600 = vmul.f32 %v585, %v595
      %v601 = vmul.f32 %v586, %v593
      %v602 = vmul.f32 %v587, %v591
      %v603 = vmul.f32 %v588, %v595
      %v604 = vmul.f32 %v589, %v593
      %v605 = vpack.c.bf16 %v602, %v599
      %v606 = vpack.c.bf16 %v603, %v600
      %v607 = vpack.c.bf16 %v604, %v601
      %611 = vrot.lane.b32.xlu0 %v605, 111
      %v612 = vpop.permute.xlu0 %611
      %613 = vrot.lane.b32.xlu0 %v606, 111
      %v614 = vpop.permute.xlu0 %613
      %615 = vrot.lane.b32.xlu0 %v607, 111
      %v616 = vpop.permute.xlu0 %615
      %vm617 = vcmask 908288
      %v618 = vsel %vm617, %v612, %v614
      %v619 = vsel %vm617, %v614, %v616
      %622 = vst [vmem:[#allocation4 + $0x80] sm:$0xff] %v618
      %623 = vst [vmem:[#allocation4 + $0x88] sm:$0xff] %v619
      %v624 = vld [vmem:[#allocation4] sm:$0xff]
      %v625 = vld [vmem:[#allocation4 + $0x8] sm:$0xff]
      %v626 = vld [vmem:[#allocation4 + $0x10] sm:$0xff]
      %v627 = vld [vmem:[#allocation4 + $0x18] sm:$0xff]
      %v628 = vld [vmem:[#allocation4 + $0x20] sm:$0xff]
      %v629 = vld [vmem:[#allocation4 + $0x28] sm:$0xff]
      %v630 = vld [vmem:[#allocation4 + $0x30] sm:$0xff]
      %v631 = vld [vmem:[#allocation4 + $0x38] sm:$0xff]
      %v632 = vld [vmem:[#allocation4 + $0x40] sm:$0xff]
      %v633 = vld [vmem:[#allocation4 + $0x48] sm:$0xff]
      %v634 = vld [vmem:[#allocation4 + $0x50] sm:$0xff]
      %v635 = vld [vmem:[#allocation4 + $0x58] sm:$0xff]
      %v636 = vld [vmem:[#allocation4 + $0x60] sm:$0xff]
      %v637 = vld [vmem:[#allocation4 + $0x68] sm:$0xff]
      %v638 = vld [vmem:[#allocation4 + $0x70] sm:$0xff]
      %v639 = vld [vmem:[#allocation4 + $0x78] sm:$0xff]
      %v640 = vld [vmem:[#allocation4 + $0x80] sm:$0xff]
      %v641 = vld [vmem:[#allocation4 + $0x88] sm:$0xff]
      %643 = vset.pattern.permute.xlu0 0
      %644 = vperm.xlu0 %643, %v289
      %v645 = vpop.permute.xlu0 %644
      %648 = vset.pattern.permute.xlu0 0
      %649 = vperm.xlu0 %648, %v290
      %v650 = vpop.permute.xlu0 %649
      %v654 = vunpack.c.l.b16 %v286
      %v655 = vunpack.c.h.b16 %v286
      %v656 = vunpack.c.l.b16 %v287
      %v657 = vunpack.c.h.b16 %v287
      %v658 = vpack.c.b16 %v656, %v654
      %v659 = vpack.c.b16 %v657, %v655
      %vm661 = vcmask 130048
      %v663 = vsel %vm661, %v659, 0
      %665 = vmatprep.subr.bf16.mxu0 %v625
      %666 = vmatpush1.bf16.msra.mxu0 %v624
      %667 = vmatprep.subr.bf16.mxu0 %v627
      %668 = vmatpush1.bf16.msra.mxu0 %v626
      %669 = vmatprep.subr.bf16.mxu0 %v629
      %670 = vmatpush1.bf16.msra.mxu0 %v628
      %671 = vmatprep.subr.bf16.mxu0 %v631
      %672 = vmatpush1.bf16.msra.mxu0 %v630
      %673 = vmatprep.subr.bf16.mxu0 %v633
      %674 = vmatpush1.bf16.msra.mxu0 %v632
      %675 = vmatprep.subr.bf16.mxu0 %v635
      %676 = vmatpush1.bf16.msra.mxu0 %v634
      %677 = vmatprep.subr.bf16.mxu0 %v637
      %678 = vmatpush1.bf16.msra.mxu0 %v636
      %679 = vmatprep.subr.bf16.mxu0 %v639
      %680 = vmatpush1.bf16.msra.mxu0 %v638
      %681 = vmatprep.subr.bf16.mxu0 %v641
      %682 = vmatpush1.bf16.msra.mxu0 %v640
      %683 = vmatprep.subr.bf16.mxu0 0
      %684 = vmatpush1.bf16.msra.mxu0 0
      %685 = vmatprep.subr.bf16.mxu0 0
      %686 = vmatpush1.bf16.msra.mxu0 0
      %687 = vmatprep.subr.bf16.mxu0 0
      %688 = vmatpush1.bf16.msra.mxu0 0
      %689 = vmatprep.subr.bf16.mxu0 0
      %690 = vmatpush1.bf16.msra.mxu0 0
      %691 = vmatprep.subr.bf16.mxu0 0
      %692 = vmatpush1.bf16.msra.mxu0 0
      %693 = vmatprep.subr.bf16.mxu0 0
      %694 = vmatpush1.bf16.msra.mxu0 0
      %695 = vmatprep.subr.bf16.mxu0 0
      %696 = vmatpush1.bf16.msra.mxu0 0
      %697 = vmatprep.mubr.bf16.mxu0 %v663
      %698 = vmatmul.mubr.bf16.gmra.mrb[0].mxu0 %v658
      %v699 = vpop.f32.mrb[0].mxu0
      %v700 = vadd.f32 %v645, %v699
      %v701 = vpop.f32.mrb[0].mxu0
      %v702 = vadd.f32 %v645, %v701
      %v703 = vpop.f32.mrb[0].mxu0
      %v704 = vadd.f32 %v650, %v703
      %v705 = vpop.f32.mrb[0].mxu0
      %v706 = vadd.f32 %v650, %v705
      %707 = vdwg.mxu0
      %v708 = vmax.f32 %v700, 0.0
      %v709 = vmax.f32 %v702, 0.0
      %v710 = vmax.f32 %v704, 0.0
      %v711 = vmax.f32 %v706, 0.0
      %v712 = vpack.c.bf16 %v710, %v708
      %v713 = vpack.c.bf16 %v711, %v709
      %714 = vst [vmem:[#allocation3 + $0x8] sm:$0xff] %v712
      %715 = vst [vmem:[#allocation3 + $0x10] sm:$0xff] %v713
      %v716 = vld [vmem:[#allocation3] sm:$0xff]
      %v717 = vld [vmem:[#allocation3 + $0x8] sm:$0xff]
      %v718 = vld [vmem:[#allocation3 + $0x10] sm:$0xff]
      %v719 = vunpack.c.l.bf16 %v716
      %v720 = vunpack.c.l.bf16 %v717
      %v721 = vunpack.c.l.bf16 %v718
      %v722 = vunpack.c.h.bf16 %v716
      %v723 = vunpack.c.h.bf16 %v717
      %v724 = vunpack.c.h.bf16 %v718
      %v725 = vmul.f32 %v719, %v325
      %v726 = vmul.f32 %v720, %v329
      %v727 = vmul.f32 %v721, %v327
      %v728 = vmul.f32 %v722, %v325
      %v729 = vmul.f32 %v723, %v329
      %v730 = vmul.f32 %v724, %v327
      %v731 = vpack.c.bf16 %v728, %v725
      %v732 = vpack.c.bf16 %v729, %v726
      %v733 = vpack.c.bf16 %v730, %v727
      %737 = vrot.lane.b32.xlu0 %v731, 17
      %v738 = vpop.permute.xlu0 %737
      %739 = vrot.lane.b32.xlu0 %v732, 17
      %v740 = vpop.permute.xlu0 %739
      %741 = vrot.lane.b32.xlu0 %v733, 17
      %v742 = vpop.permute.xlu0 %741
      %v743 = vsel %vm351, %v738, %v740
      %v744 = vsel %vm351, %v740, %v742
      %747 = vst [vmem:[#allocation5] sm:$0xff] %v743
      %748 = vst [vmem:[#allocation5 + $0x8] sm:$0xff] %v744
      %v749 = vld [vmem:[#allocation3] sm:$0xff]
      %v750 = vld [vmem:[#allocation3 + $0x8] sm:$0xff]
      %v751 = vld [vmem:[#allocation3 + $0x10] sm:$0xff]
      %755 = vrot.lane.b32.xlu0 %v749, 16
      %v756 = vpop.permute.xlu0 %755
      %757 = vrot.lane.b32.xlu0 %v750, 16
      %v758 = vpop.permute.xlu0 %757
      %759 = vrot.lane.b32.xlu0 %v751, 16
      %v760 = vpop.permute.xlu0 %759
      %v761 = vsel %vm370, %v756, %v758
      %v762 = vsel %vm370, %v758, %v760
      %765 = vst [vmem:[#allocation5 + $0x10] sm:$0xff] %v761
      %766 = vst [vmem:[#allocation5 + $0x18] sm:$0xff] %v762
      %v767 = vld [vmem:[#allocation3] sm:$0xff]
      %v768 = vld [vmem:[#allocation3 + $0x8] sm:$0xff]
      %v769 = vld [vmem:[#allocation3 + $0x10] sm:$0xff]
      %v770 = vunpack.c.l.bf16 %v767
      %v771 = vunpack.c.l.bf16 %v768
      %v772 = vunpack.c.l.bf16 %v769
      %v773 = vunpack.c.h.bf16 %v767
      %v774 = vunpack.c.h.bf16 %v768
      %v775 = vunpack.c.h.bf16 %v769
      %v776 = vmul.f32 %v770, %v396
      %v777 = vmul.f32 %v771, %v400
      %v778 = vmul.f32 %v772, %v398
      %v779 = vmul.f32 %v773, %v396
      %v780 = vmul.f32 %v774, %v400
      %v781 = vmul.f32 %v775, %v398
      %v782 = vpack.c.bf16 %v779, %v776
      %v783 = vpack.c.bf16 %v780, %v777
      %v784 = vpack.c.bf16 %v781, %v778
      %788 = vrot.lane.b32.xlu0 %v782, 15
      %v789 = vpop.permute.xlu0 %788
      %790 = vrot.lane.b32.xlu0 %v783, 15
      %v791 = vpop.permute.xlu0 %790
      %792 = vrot.lane.b32.xlu0 %v784, 15
      %v793 = vpop.permute.xlu0 %792
      %v794 = vsel %vm422, %v789, %v791
      %v795 = vsel %vm422, %v791, %v793
      %798 = vst [vmem:[#allocation5 + $0x20] sm:$0xff] %v794
      %799 = vst [vmem:[#allocation5 + $0x28] sm:$0xff] %v795
      %v800 = vld [vmem:[#allocation3] sm:$0xff]
      %v801 = vld [vmem:[#allocation3 + $0x8] sm:$0xff]
      %v802 = vld [vmem:[#allocation3 + $0x10] sm:$0xff]
      %v803 = vunpack.c.l.bf16 %v800
      %v804 = vunpack.c.l.bf16 %v801
      %v805 = vunpack.c.l.bf16 %v802
      %v806 = vunpack.c.h.bf16 %v800
      %v807 = vunpack.c.h.bf16 %v801
      %v808 = vunpack.c.h.bf16 %v802
      %v809 = vmul.f32 %v803, %v439
      %v810 = vmul.f32 %v804, %v443
      %v811 = vmul.f32 %v805, %v441
      %v812 = vmul.f32 %v806, %v439
      %v813 = vmul.f32 %v807, %v443
      %v814 = vmul.f32 %v808, %v441
      %v815 = vpack.c.bf16 %v812, %v809
      %v816 = vpack.c.bf16 %v813, %v810
      %v817 = vpack.c.bf16 %v814, %v811
      %821 = vrot.lane.b32.xlu0 %v815, 1
      %v822 = vpop.permute.xlu0 %821
      %823 = vrot.lane.b32.xlu0 %v816, 1
      %v824 = vpop.permute.xlu0 %823
      %825 = vrot.lane.b32.xlu0 %v817, 1
      %v826 = vpop.permute.xlu0 %825
      %v827 = vsel %vm465, %v822, %v824
      %v828 = vsel %vm465, %v824, %v826
      %831 = vst [vmem:[#allocation5 + $0x30] sm:$0xff] %v827
      %832 = vst [vmem:[#allocation5 + $0x38] sm:$0xff] %v828
      %v833 = vld [vmem:[#allocation3 + $0x8] sm:$0xff]
      %v834 = vld [vmem:[#allocation3 + $0x10] sm:$0xff]
      %835 = vst [vmem:[#allocation5 + $0x40] sm:$0xff] %v833
      %836 = vst [vmem:[#allocation5 + $0x48] sm:$0xff] %v834
      %v837 = vld [vmem:[#allocation3 + $0x8] sm:$0xff]
      %v838 = vld [vmem:[#allocation3 + $0x10] sm:$0xff]
      %v839 = vld [vmem:[#allocation3 + $0x18] sm:$0xff]
      %v840 = vunpack.c.l.bf16 %v837
      %v841 = vunpack.c.l.bf16 %v838
      %v842 = vunpack.c.l.bf16 %v839
      %v843 = vunpack.c.h.bf16 %v837
      %v844 = vunpack.c.h.bf16 %v838
      %v845 = vunpack.c.h.bf16 %v839
      %v846 = vmul.f32 %v840, %v486
      %v847 = vmul.f32 %v841, %v490
      %v848 = vmul.f32 %v842, %v488
      %v849 = vmul.f32 %v843, %v486
      %v850 = vmul.f32 %v844, %v490
      %v851 = vmul.f32 %v845, %v488
      %v852 = vpack.c.bf16 %v849, %v846
      %v853 = vpack.c.bf16 %v850, %v847
      %v854 = vpack.c.bf16 %v851, %v848
      %858 = vrot.lane.b32.xlu0 %v852, 127
      %v859 = vpop.permute.xlu0 %858
      %860 = vrot.lane.b32.xlu0 %v853, 127
      %v861 = vpop.permute.xlu0 %860
      %862 = vrot.lane.b32.xlu0 %v854, 127
      %v863 = vpop.permute.xlu0 %862
      %v864 = vsel %vm512, %v859, %v861
      %v865 = vsel %vm512, %v861, %v863
      %868 = vst [vmem:[#allocation5 + $0x50] sm:$0xff] %v864
      %869 = vst [vmem:[#allocation5 + $0x58] sm:$0xff] %v865
      %v870 = vld [vmem:[#allocation3 + $0x8] sm:$0xff]
      %v871 = vld [vmem:[#allocation3 + $0x10] sm:$0xff]
      %v872 = vld [vmem:[#allocation3 + $0x18] sm:$0xff]
      %v873 = vunpack.c.l.bf16 %v870
      %v874 = vunpack.c.l.bf16 %v871
      %v875 = vunpack.c.l.bf16 %v872
      %v876 = vunpack.c.h.bf16 %v870
      %v877 = vunpack.c.h.bf16 %v871
      %v878 = vunpack.c.h.bf16 %v872
      %v879 = vmul.f32 %v873, %v529
      %v880 = vmul.f32 %v874, %v533
      %v881 = vmul.f32 %v875, %v531
      %v882 = vmul.f32 %v876, %v529
      %v883 = vmul.f32 %v877, %v533
      %v884 = vmul.f32 %v878, %v531
      %v885 = vpack.c.bf16 %v882, %v879
      %v886 = vpack.c.bf16 %v883, %v880
      %v887 = vpack.c.bf16 %v884, %v881
      %891 = vrot.lane.b32.xlu0 %v885, 113
      %v892 = vpop.permute.xlu0 %891
      %893 = vrot.lane.b32.xlu0 %v886, 113
      %v894 = vpop.permute.xlu0 %893
      %895 = vrot.lane.b32.xlu0 %v887, 113
      %v896 = vpop.permute.xlu0 %895
      %v897 = vsel %vm555, %v892, %v894
      %v898 = vsel %vm555, %v894, %v896
      %901 = vst [vmem:[#allocation5 + $0x60] sm:$0xff] %v897
      %902 = vst [vmem:[#allocation5 + $0x68] sm:$0xff] %v898
      %v903 = vld [vmem:[#allocation3 + $0x8] sm:$0xff]
      %v904 = vld [vmem:[#allocation3 + $0x10] sm:$0xff]
      %v905 = vld [vmem:[#allocation3 + $0x18] sm:$0xff]
      %909 = vrot.lane.b32.xlu0 %v903, 112
      %v910 = vpop.permute.xlu0 %909
      %911 = vrot.lane.b32.xlu0 %v904, 112
      %v912 = vpop.permute.xlu0 %911
      %913 = vrot.lane.b32.xlu0 %v905, 112
      %v914 = vpop.permute.xlu0 %913
      %v915 = vsel %vm574, %v910, %v912
      %v916 = vsel %vm574, %v912, %v914
      %919 = vst [vmem:[#allocation5 + $0x70] sm:$0xff] %v915
      %920 = vst [vmem:[#allocation5 + $0x78] sm:$0xff] %v916
      %v921 = vld [vmem:[#allocation3 + $0x8] sm:$0xff]
      %v922 = vld [vmem:[#allocation3 + $0x10] sm:$0xff]
      %v923 = vld [vmem:[#allocation3 + $0x18] sm:$0xff]
      %v924 = vunpack.c.l.bf16 %v921
      %v925 = vunpack.c.l.bf16 %v922
      %v926 = vunpack.c.l.bf16 %v923
      %v927 = vunpack.c.h.bf16 %v921
      %v928 = vunpack.c.h.bf16 %v922
      %v929 = vunpack.c.h.bf16 %v923
      %v930 = vmul.f32 %v924, %v591
      %v931 = vmul.f32 %v925, %v595
      %v932 = vmul.f32 %v926, %v593
      %v933 = vmul.f32 %v927, %v591
      %v934 = vmul.f32 %v928, %v595
      %v935 = vmul.f32 %v929, %v593
      %v936 = vpack.c.bf16 %v933, %v930
      %v937 = vpack.c.bf16 %v934, %v931
      %v938 = vpack.c.bf16 %v935, %v932
      %942 = vrot.lane.b32.xlu0 %v936, 111
      %v943 = vpop.permute.xlu0 %942
      %944 = vrot.lane.b32.xlu0 %v937, 111
      %v945 = vpop.permute.xlu0 %944
      %946 = vrot.lane.b32.xlu0 %v938, 111
      %v947 = vpop.permute.xlu0 %946
      %v948 = vsel %vm617, %v943, %v945
      %v949 = vsel %vm617, %v945, %v947
      %952 = vst [vmem:[#allocation5 + $0x80] sm:$0xff] %v948
      %953 = vst [vmem:[#allocation5 + $0x88] sm:$0xff] %v949
      %v954 = vld [vmem:[#allocation5] sm:$0xff]
      %v955 = vld [vmem:[#allocation5 + $0x8] sm:$0xff]
      %v956 = vld [vmem:[#allocation5 + $0x10] sm:$0xff]
      %v957 = vld [vmem:[#allocation5 + $0x18] sm:$0xff]
      %v958 = vld [vmem:[#allocation5 + $0x20] sm:$0xff]
      %v959 = vld [vmem:[#allocation5 + $0x28] sm:$0xff]
      %v960 = vld [vmem:[#allocation5 + $0x30] sm:$0xff]
      %v961 = vld [vmem:[#allocation5 + $0x38] sm:$0xff]
      %v962 = vld [vmem:[#allocation5 + $0x40] sm:$0xff]
      %v963 = vld [vmem:[#allocation5 + $0x48] sm:$0xff]
      %v964 = vld [vmem:[#allocation5 + $0x50] sm:$0xff]
      %v965 = vld [vmem:[#allocation5 + $0x58] sm:$0xff]
      %v966 = vld [vmem:[#allocation5 + $0x60] sm:$0xff]
      %v967 = vld [vmem:[#allocation5 + $0x68] sm:$0xff]
      %v968 = vld [vmem:[#allocation5 + $0x70] sm:$0xff]
      %v969 = vld [vmem:[#allocation5 + $0x78] sm:$0xff]
      %v970 = vld [vmem:[#allocation5 + $0x80] sm:$0xff]
      %v971 = vld [vmem:[#allocation5 + $0x88] sm:$0xff]
      %973 = vset.pattern.permute.xlu0 0
      %974 = vperm.xlu0 %973, %v291
      %v975 = vpop.permute.xlu0 %974
      %v978 = vunpack.c.l.b16 %v288
      %v979 = vunpack.c.h.b16 %v288
      %v980 = vpack.c.b16 %v978, %v978
      %v981 = vpack.c.b16 %v979, %v979
      %v984 = vsel %vm661, %v981, 0
      %986 = vmatprep.subr.bf16.mxu0 %v955
      %987 = vmatpush1.bf16.msra.mxu0 %v954
      %988 = vmatprep.subr.bf16.mxu0 %v957
      %989 = vmatpush1.bf16.msra.mxu0 %v956
      %990 = vmatprep.subr.bf16.mxu0 %v959
      %991 = vmatpush1.bf16.msra.mxu0 %v958
      %992 = vmatprep.subr.bf16.mxu0 %v961
      %993 = vmatpush1.bf16.msra.mxu0 %v960
      %994 = vmatprep.subr.bf16.mxu0 %v963
      %995 = vmatpush1.bf16.msra.mxu0 %v962
      %996 = vmatprep.subr.bf16.mxu0 %v965
      %997 = vmatpush1.bf16.msra.mxu0 %v964
      %998 = vmatprep.subr.bf16.mxu0 %v967
      %999 = vmatpush1.bf16.msra.mxu0 %v966
      %1000 = vmatprep.subr.bf16.mxu0 %v969
      %1001 = vmatpush1.bf16.msra.mxu0 %v968
      %1002 = vmatprep.subr.bf16.mxu0 %v971
      %1003 = vmatpush1.bf16.msra.mxu0 %v970
      %1004 = vmatprep.subr.bf16.mxu0 0
      %1005 = vmatpush1.bf16.msra.mxu0 0
      %1006 = vmatprep.subr.bf16.mxu0 0
      %1007 = vmatpush1.bf16.msra.mxu0 0
      %1008 = vmatprep.subr.bf16.mxu0 0
      %1009 = vmatpush1.bf16.msra.mxu0 0
      %1010 = vmatprep.subr.bf16.mxu0 0
      %1011 = vmatpush1.bf16.msra.mxu0 0
      %1012 = vmatprep.subr.bf16.mxu0 0
      %1013 = vmatpush1.bf16.msra.mxu0 0
      %1014 = vmatprep.subr.bf16.mxu0 0
      %1015 = vmatpush1.bf16.msra.mxu0 0
      %1016 = vmatprep.subr.bf16.mxu0 0
      %1017 = vmatpush1.bf16.msra.mxu0 0
      %1018 = vmatprep.mubr.bf16.mxu0 %v984
      %1019 = vmatmul.mubr.bf16.gmra.mrb[0].mxu0 %v980
      %v1020 = vpop.f32.mrb[0].mxu0
      %v1021 = vadd.f32 %v975, %v1020
      %v1022 = vpop.f32.mrb[0].mxu0
      %v1023 = vadd.f32 %v975, %v1022
      %v1024 = vpop.f32.mrb[0].mxu0
      %v1025 = vpop.f32.mrb[0].mxu0
      %1026 = vdwg.mxu0
      %v1027 = vmax.f32 %v1021, 0.0
      %v1028 = vmax.f32 %v1023, 0.0
      %1029 = vst [vmem:[%s278] sm:$0xff] %v1027
      %1030 = vst [vmem:[%s278 + $0x8] sm:$0xff] %v1028
      %p1031 = scmp.lt.s32.totalorder %s18, 1
      %s1032 = scalar_select %p1031, %s18, 1
      %s1033 = smul.addr %s1032, 2
      %s1034 = smul.addr %s1033, 8
      %s1035 = scalar_lea.vmem %s7, %s1034
      // Predicated region
      $region49: #{doble_conv_forward.1} parent=47 // pred_check
        %p1036 = pneg %p188
      $region50: #{doble_conv_forward.1} parent=47 // pred_check_branch
        %1038 = sbr.rel (%p1036) target = $region52
      $region51: #{doble_conv_forward.1} parent=47 // pred_region
        _
      $region52: #{doble_conv_forward.1} parent=47 // pred_fallthru
        _
    $region48: #{doble_conv_forward.1} parent=5 // pred_fallthru
      _
    %p1039 = scmp.le.s32.totalorder 2, %s13
    // Predicated region
    $region53: #{doble_conv_forward.1} parent=5 // pred_check
      %p1040 = pneg %p1039
    $region54: #{doble_conv_forward.1} parent=5 // pred_check_branch
      %1042 = sbr.rel (%p1040) target = $region56
    $region55: #{doble_conv_forward.1} parent=5 // pred_region
      %s1043 = ssub.s32 %s13, 2
      // Predicated region
      $region57: #{doble_conv_forward.1} parent=55 // pred_check
        %p1044 = pneg %p194
      $region58: #{doble_conv_forward.1} parent=55 // pred_check_branch
        %1046 = sbr.rel (%p1044) target = $region60
      $region59: #{doble_conv_forward.1} parent=55 // pred_region
        %p1047 = scmp.lt.s32.totalorder %s19, 1
        %s1048 = scalar_select %p1047, %s19, 1
        %s1049 = smul.addr %s1048, 2
        %s1050 = smul.addr %s1049, 8
        %s1051 = scalar_lea.vmem %s7, %s1050
      $region60: #{doble_conv_forward.1} parent=55 // pred_fallthru
        _
    $region56: #{doble_conv_forward.1} parent=5 // pred_fallthru
      _
  $region6: #{doble_conv_forward.1} parent=0 // loop_footer
    %s17 = sadd.s32 1, %s13
  $region7: #{doble_conv_forward.1} parent=0 // loop_footer_branch
    %12 = sbr.rel target = $region3
  $region8: #{doble_conv_forward.1} parent=0 // loop_exit
    _

</llo_original>
